<compile_context>
chip_gen: v7x
topology: tpu7x:2x2x1
jax: 0.10.0
libtpu: 0.0.40
codegen_flags: <defaults>
</compile_context>

<pallas_src>
import jax
import jax.numpy as jnp
from jax import lax
from jax.experimental import pallas as pl
from jax.experimental.pallas import tpu as pltpu


def _dims(d):
    return (d["C"], d["T"], d["F1"], d["D"], d["F2"], d["NC"], d["K1"], d["K3"])


def _derived(dims):
    C, T, F1, D, F2, NC, K1, K3 = _dims(dims)
    Tc = T + 1            # conv1 output width: T + 2*(K1//2) - K1 + 1
    P1 = Tc // 4          # after AvgPool2d((1, 4))
    Tp = P1 + 1           # after separable (1,16) conv with pad 8
    P2 = Tp // 8          # after AvgPool2d((1, 8))
    return Tc, P1, Tp, P2


def _elu(v):
    # ELU(alpha=1): x for x>0 else exp(x)-1 (min() avoids overflow on the
    # not-taken branch of the select).
    return jnp.where(v > 0, v, jnp.exp(jnp.minimum(v, 0.0)) - 1.0)


def _make_kernel():
    def kernel(x_ref, w1_ref, b1_ref, w2_ref, b2_ref, wc_ref, bc_ref, out_ref):
        # ---- stage 1: depthwise channel mix + conv1 + bn1/bn2 scales as ONE
        #      lane-dense MXU matmul (K = C*T).
        h1 = jnp.dot(x_ref[...], w1_ref[...],
                     preferred_element_type=jnp.float32)            # (N, DF1*Tc)
        h1 = _elu(h1 + b1_ref[...])

        # ---- stage 2: avgpool(1,4) + pad + separable(1,16) + pointwise(1,1)
        #      + bn3 scale folded offline into one operator (K = DF1*Tc).
        h2 = jnp.dot(h1.astype(w2_ref.dtype), w2_ref[...],
                     preferred_element_type=jnp.float32)            # (N, F2*Tp)
        h2 = _elu(h2 + b2_ref[...])

        # ---- stage 3: avgpool(1,8) + flatten + classifier folded into wc;
        #      logits produced lane-dense as (NC, N) in one contraction.
        logits = lax.dot_general(wc_ref[...], h2, (((1,), (1,)), ((), ())),
                                 preferred_element_type=jnp.float32)  # (NC, N)
        logits = logits + bc_ref[...]

        # ---- log_softmax over classes (sublane axis), lane-dense output block.
        m = jnp.max(logits, axis=0, keepdims=True)
        sh = logits - m
        lse = jnp.log(jnp.sum(jnp.exp(sh), axis=0, keepdims=True))
        out_ref[...] = sh - lse

    return kernel


def init_params(key, dims):
    C, T, F1, D, F2, NC, K1, K3 = _dims(dims)
    DF1 = D * F1
    keys = iter(jax.random.split(key, 18))

    def nrm(shape, scale):
        return (scale * jax.random.normal(next(keys), shape)).astype(jnp.float32)

    def bn(nch):
        g = (1.0 + 0.1 * jax.random.normal(next(keys), (nch,))).astype(jnp.float32)
        b = (0.1 * jax.random.normal(next(keys), (nch,))).astype(jnp.float32)
        m = (0.1 * jax.random.normal(next(keys), (nch,))).astype(jnp.float32)
        v = (0.5 + jax.random.uniform(next(keys), (nch,))).astype(jnp.float32)
        return g, b, m, v

    p = {}
    p["w1"] = nrm((F1, K1), 1.0 / K1 ** 0.5)
    p["bn1_g"], p["bn1_b"], p["bn1_m"], p["bn1_v"] = bn(F1)
    p["dw"] = nrm((DF1, C), 1.0 / C ** 0.5)
    p["bn2_g"], p["bn2_b"], p["bn2_m"], p["bn2_v"] = bn(DF1)
    p["w3"] = nrm((F2, DF1, K3), 1.0 / (DF1 * K3) ** 0.5)
    p["w4"] = nrm((F2, F2), 1.0 / F2 ** 0.5)
    p["bn3_g"], p["bn3_b"], p["bn3_m"], p["bn3_v"] = bn(F2)
    feat = F2 * (T // 32)
    p["wc"] = nrm((NC, feat), 1.0 / feat ** 0.5)
    p["bc"] = nrm((NC,), 0.1)
    return p


def pack_params(p, dims, matmul_dtype=jnp.bfloat16):
    """Fold BN, padding, pooling, depthwise grouping, the pointwise conv and the
    flatten order into three constant operators so the kernel is 3 matmuls."""
    C, T, F1, D, F2, NC, K1, K3 = _dims(dims)
    DF1 = D * F1
    Tc, P1, Tp, P2 = _derived(dims)
    pad1 = K1 // 2
    pad3 = K3 // 2

    def fold(g, b, m, v, eps=1e-5):
        s = g / jnp.sqrt(v + eps)
        return s, b - m * s

    s1, t1 = fold(p["bn1_g"], p["bn1_b"], p["bn1_m"], p["bn1_v"])
    s2, t2 = fold(p["bn2_g"], p["bn2_b"], p["bn2_m"], p["bn2_v"])
    s3, t3 = fold(p["bn3_g"], p["bn3_b"], p["bn3_m"], p["bn3_v"])

    # conv1 as a Toeplitz band (zero padding of K1//2 is implicit in the band).
    t_idx = jnp.arange(T)[:, None]
    s_idx = jnp.arange(Tc)[None, :]
    k_idx = t_idx - s_idx + pad1                                      # (T, Tc)
    valid = (k_idx >= 0) & (k_idx < K1)
    toep = jnp.where(valid[None, :, :],
                     p["w1"][:, jnp.clip(k_idx, 0, K1 - 1)], 0.0)     # (F1, T, Tc)

    grp = jnp.arange(DF1) // D                                        # group of each dw chan

    # Stage-1 operator: W1[(c,t),(d,s)] = dw[d,c]*toep[d//D,t,s]*s1[d//D]*s2[d]
    dw_sc = p["dw"] * (s1[grp] * s2)[:, None]                         # (DF1, C)
    w1op = jnp.einsum("dc,dts->ctds", dw_sc, toep[grp])               # (C,T,DF1,Tc)
    w1op = w1op.reshape(C * T, DF1 * Tc)
    # Stage-1 bias: bn1 shift pushed through the depthwise conv, bn2 folded in.
    rdw = jnp.sum(p["dw"], axis=1)                                    # (DF1,)
    b1 = jnp.repeat(s2 * t1[grp] * rdw + t2, Tc)[None, :]             # (1, DF1*Tc)

    # avgpool(1,4) into the zero-padded separable-conv coordinate frame.
    r = jnp.arange(Tc)[:, None]
    c = jnp.arange(P1 + 2 * pad3)[None, :]
    pool1 = jnp.where((c == pad3 + r // 4) & (r < 4 * P1), 0.25, 0.0)  # (Tc, P1+2*pad3)
    # sliding window unfold: pool1_unf[s, p, k] = pool1[s, p + k]
    pool1_unf = pool1[:, jnp.arange(Tp)[:, None] + jnp.arange(K3)[None, :]]  # (Tc,Tp,K3)

    # Stage-2 operator: W2[(d,s),(f,p)] = s3[f]*sum_k (w4@w3)[f,d,k]*pool1[s,p+k]
    w34 = jnp.einsum("fg,gdk->fdk", p["w4"], p["w3"])                 # (F2, DF1, K3)
    w2op = jnp.einsum("fdk,spk,f->dsfp", w34, pool1_unf, s3)          # (DF1,Tc,F2,Tp)
    w2op = w2op.reshape(DF1 * Tc, F2 * Tp)
    b2 = jnp.repeat(t3, Tp)[None, :]                                  # (1, F2*Tp)

    # classifier with avgpool(1,8) + flatten (index f*P2 + q) folded in.
    q = jnp.arange(Tp) // 8
    valid2 = jnp.arange(Tp) < 8 * P2
    wc3 = p["wc"].reshape(NC, F2, P2)[:, :, jnp.clip(q, 0, P2 - 1)] / 8.0  # (NC,F2,Tp)
    wcp = jnp.where(valid2[None, None, :], wc3, 0.0).reshape(NC, F2 * Tp)

    return {
        "w1op": w1op.astype(matmul_dtype),
        "b1": b1.astype(jnp.float32),
        "w2op": w2op.astype(matmul_dtype),
        "b2": b2.astype(jnp.float32),
        "wcp": wcp.astype(jnp.float32),        # classifier stage kept in f32 (tiny)
        "bc": p["bc"][:, None].astype(jnp.float32),
        "matmul_dtype": matmul_dtype,
    }


def _const_spec(a):
    nd = a.ndim
    return pl.BlockSpec(a.shape, lambda i, _z=(0,) * nd: _z)


def eegnet_pallas(x, packed, dims, block_b=512):
    C, T, F1, D, F2, NC, K1, K3 = _dims(dims)
    DF1 = D * F1
    Tc, P1, Tp, P2 = _derived(dims)
    assert T % 32 == 0, "num_time_points must be a multiple of 32"

    B = x.shape[0]
    # Batch block: multiples of 128 when tiling (keeps the (8,128) layout rule and
    # full-width unmasked output stores); aim for >= 2 grid steps when the batch
    # allows, so v7x's two TensorCores both get work via the "parallel" axis.
    if B <= 128:
        N = B
    else:
        N = min(int(block_b), 128 * ((B + 255) // 256))
        N = max(128, (N // 128) * 128)
    n_steps = -(-B // N)
    Bp = n_steps * N

    mmdt = packed["matmul_dtype"]
    # Layout plumbing only: drop the singleton conv channel, flatten (C,T) so the
    # kernel sees a lane-dense (N, C*T) block, pad batch to a block multiple.
    xs = x[:, 0, :, :].reshape(B, C * T).astype(mmdt)
    if Bp != B:
        xs = jnp.pad(xs, ((0, Bp - B), (0, 0)))

    kernel = _make_kernel()
    in_specs = [
        pl.BlockSpec((N, C * T), lambda i: (i, 0)),
        _const_spec(packed["w1op"]), _const_spec(packed["b1"]),
        _const_spec(packed["w2op"]), _const_spec(packed["b2"]),
        _const_spec(packed["wcp"]), _const_spec(packed["bc"]),
    ]
    out_spec = pl.BlockSpec((NC, N), lambda i: (0, i))

    out = pl.pallas_call(
        kernel,
        grid=(n_steps,),
        in_specs=in_specs,
        out_specs=out_spec,
        out_shape=jax.ShapeDtypeStruct((NC, Bp), jnp.float32),
        compiler_params=pltpu.CompilerParams(
            dimension_semantics=("parallel",),
            # Actual usage is a few MiB even at block_b=1024; 48 MiB leaves
            # headroom on v5e/v6e (128 MiB) and stays under v7x's 64 MiB/TC.
            vmem_limit_bytes=48 * 1024 * 1024),
    )(xs, packed["w1op"], packed["b1"], packed["w2op"], packed["b2"],
      packed["wcp"], packed["bc"])
    return out[:, :B].T                                               # (B, NC)


def eegnet_reference(x, p, dims):
    """Pure-JAX (lax conv) mirror of the PyTorch eval-mode forward, for checking."""
    C, T, F1, D, F2, NC, K1, K3 = _dims(dims)
    DF1 = D * F1
    dn = ("NCHW", "OIHW", "NCHW")

    def bn4(y, g, b, m, v, eps=1e-5):
        shp = (1, -1, 1, 1)
        return ((y - m.reshape(shp)) / jnp.sqrt(v.reshape(shp) + eps)
                * g.reshape(shp) + b.reshape(shp))

    y = lax.conv_general_dilated(x, p["w1"].reshape(F1, 1, 1, K1), (1, 1),
                                 ((0, 0), (K1 // 2, K1 // 2)),
                                 dimension_numbers=dn)
    y = bn4(y, p["bn1_g"], p["bn1_b"], p["bn1_m"], p["bn1_v"])
    y = lax.conv_general_dilated(y, p["dw"].reshape(DF1, 1, C, 1), (1, 1),
                                 "VALID", dimension_numbers=dn,
                                 feature_group_count=F1)
    y = bn4(y, p["bn2_g"], p["bn2_b"], p["bn2_m"], p["bn2_v"])
    y = jax.nn.elu(y)
    w = y.shape[-1]
    q = w // 4
    y = y[..., :4 * q].reshape(y.shape[0], DF1, 1, q, 4).mean(-1)
    y = lax.conv_general_dilated(y, p["w3"].reshape(F2, DF1, 1, K3), (1, 1),
                                 ((0, 0), (8, 8)), dimension_numbers=dn)
    y = lax.conv_general_dilated(y, p["w4"].reshape(F2, F2, 1, 1), (1, 1),
                                 "VALID", dimension_numbers=dn)
    y = bn4(y, p["bn3_g"], p["bn3_b"], p["bn3_m"], p["bn3_v"])
    y = jax.nn.elu(y)
    w = y.shape[-1]
    q = w // 8
    y = y[..., :8 * q].reshape(y.shape[0], F2, 1, q, 8).mean(-1)
    flat = y.reshape(y.shape[0], -1)
    logits = flat @ p["wc"].T + p["bc"]
    return jax.nn.log_softmax(logits, axis=1)


if __name__ == "__main__":
    # Small-but-consistent shapes: num_channels=8, num_time_points=32,
    # F1=8, D=2, F2=16, num_classes=4  ->  input x: (2, 1, 8, 32)
    dims = dict(C=8, T=32, F1=8, D=2, F2=16, NC=4, K1=64, K3=16)
    B = 2

    key = jax.random.PRNGKey(0)
    kx, kp = jax.random.split(key)
    x = jax.random.normal(kx, (B, 1, dims["C"], dims["T"]), dtype=jnp.float32)

    params = init_params(kp, dims)
    ref = jax.block_until_ready(eegnet_reference(x, params, dims))

    # 1) f32 MXU operands: strict check against the lax-conv reference.
    packed_f32 = pack_params(params, dims, matmul_dtype=jnp.float32)
    out_f32 = jax.block_until_ready(eegnet_pallas(x, packed_f32, dims))
    assert out_f32.shape == (B, dims["NC"])
    err_f32 = float(jnp.max(jnp.abs(out_f32 - ref)))
    if not jnp.allclose(out_f32, ref, atol=2e-2, rtol=2e-2):
        raise AssertionError(f"f32 kernel mismatch vs reference, max abs err = {err_f32}")

    # 2) bf16 MXU operands (v6e/v7x production config), f32 accumulation.
    packed_bf16 = pack_params(params, dims, matmul_dtype=jnp.bfloat16)
    out_bf16 = jax.block_until_ready(eegnet_pallas(x, packed_bf16, dims))
    assert out_bf16.shape == (B, dims["NC"])
    err_bf16 = float(jnp.max(jnp.abs(out_bf16 - ref)))
    if not jnp.allclose(out_bf16, ref, atol=4e-2, rtol=4e-2):
        raise AssertionError(f"bf16 kernel mismatch vs reference, max abs err = {err_bf16}")

    print("KERNEL_OK")
</pallas_src>

<mosaic_0001>
module attributes {stable_mosaic.version = 11 : i64} {
  func.func @kernel(%arg0: i32, %arg1: memref<2x256xf32, #tpu.memory_space<vmem>>, %arg2: memref<256x528xf32, #tpu.memory_space<vmem>>, %arg3: memref<1x528xf32, #tpu.memory_space<vmem>>, %arg4: memref<528x144xf32, #tpu.memory_space<vmem>>, %arg5: memref<1x144xf32, #tpu.memory_space<vmem>>, %arg6: memref<4x144xf32, #tpu.memory_space<vmem>>, %arg7: memref<4x1xf32, #tpu.memory_space<vmem>>, %arg8: memref<4x2xf32, #tpu.memory_space<vmem>>) attributes {dimension_semantics = [#tpu.dimension_semantics<parallel>], iteration_bounds = array<i64: 1>, scalar_prefetch = 0 : i64, scratch_operands = 0 : i64, tpu.core_type = #tpu.core_type<tc>, window_params = [{transform_indices = @transform_0, window_bounds = array<i64: 2, 256>}, {pipeline_mode = #tpu.pipeline_mode<synchronous>, transform_indices = @transform_1, window_bounds = array<i64: 256, 528>}, {pipeline_mode = #tpu.pipeline_mode<synchronous>, transform_indices = @transform_2, window_bounds = array<i64: 1, 528>}, {pipeline_mode = #tpu.pipeline_mode<synchronous>, transform_indices = @transform_3, window_bounds = array<i64: 528, 144>}, {pipeline_mode = #tpu.pipeline_mode<synchronous>, transform_indices = @transform_4, window_bounds = array<i64: 1, 144>}, {pipeline_mode = #tpu.pipeline_mode<synchronous>, transform_indices = @transform_5, window_bounds = array<i64: 4, 144>}, {pipeline_mode = #tpu.pipeline_mode<synchronous>, transform_indices = @transform_6, window_bounds = array<i64: 4, 1>}, {transform_indices = @transform_7, window_bounds = array<i64: 4, 2>}]} {
    %c0 = arith.constant 0 : index
    %c0_0 = arith.constant 0 : index
    %0 = vector.load %arg1[%c0, %c0_0] : memref<2x256xf32, #tpu.memory_space<vmem>>, vector<2x256xf32>
    %c0_1 = arith.constant 0 : index
    %c0_2 = arith.constant 0 : index
    %1 = vector.load %arg2[%c0_1, %c0_2] : memref<256x528xf32, #tpu.memory_space<vmem>>, vector<256x528xf32>
    %cst = arith.constant dense<0.000000e+00> : vector<2x528xf32>
    %2 = tpu.matmul %0, %1, %cst {dimension_numbers = #tpu.dot_dimension_numbers<[1], [0], [0], [1], [0, 0, 1, 1], [], []>} : vector<2x256xf32>, vector<256x528xf32>, vector<2x528xf32> -> vector<2x528xf32>
    %c0_3 = arith.constant 0 : index
    %c0_4 = arith.constant 0 : index
    %3 = vector.load %arg3[%c0_3, %c0_4] : memref<1x528xf32, #tpu.memory_space<vmem>>, vector<1x528xf32>
    %4 = vector.broadcast %3 : vector<1x528xf32> to vector<2x528xf32>
    %5 = arith.addf %2, %4 : vector<2x528xf32>
    %cst_5 = arith.constant 0.000000e+00 : f32
    %6 = vector.broadcast %cst_5 : f32 to vector<2x528xf32>
    %7 = arith.cmpf ogt, %5, %6 : vector<2x528xf32>
    %cst_6 = arith.constant 0.000000e+00 : f32
    %8 = vector.broadcast %cst_6 : f32 to vector<2x528xf32>
    %9 = arith.minimumf %5, %8 : vector<2x528xf32>
    %10 = math.exp %9 : vector<2x528xf32>
    %cst_7 = arith.constant 1.000000e+00 : f32
    %11 = vector.broadcast %cst_7 : f32 to vector<2x528xf32>
    %12 = arith.subf %10, %11 : vector<2x528xf32>
    %13 = arith.select %7, %5, %12 : vector<2x528xi1>, vector<2x528xf32>
    %c0_8 = arith.constant 0 : index
    %c0_9 = arith.constant 0 : index
    %14 = vector.load %arg4[%c0_8, %c0_9] : memref<528x144xf32, #tpu.memory_space<vmem>>, vector<528x144xf32>
    %cst_10 = arith.constant dense<0.000000e+00> : vector<2x144xf32>
    %15 = tpu.matmul %13, %14, %cst_10 {dimension_numbers = #tpu.dot_dimension_numbers<[1], [0], [0], [1], [0, 0, 1, 1], [], []>} : vector<2x528xf32>, vector<528x144xf32>, vector<2x144xf32> -> vector<2x144xf32>
    %c0_11 = arith.constant 0 : index
    %c0_12 = arith.constant 0 : index
    %16 = vector.load %arg5[%c0_11, %c0_12] : memref<1x144xf32, #tpu.memory_space<vmem>>, vector<1x144xf32>
    %17 = vector.broadcast %16 : vector<1x144xf32> to vector<2x144xf32>
    %18 = arith.addf %15, %17 : vector<2x144xf32>
    %cst_13 = arith.constant 0.000000e+00 : f32
    %19 = vector.broadcast %cst_13 : f32 to vector<2x144xf32>
    %20 = arith.cmpf ogt, %18, %19 : vector<2x144xf32>
    %cst_14 = arith.constant 0.000000e+00 : f32
    %21 = vector.broadcast %cst_14 : f32 to vector<2x144xf32>
    %22 = arith.minimumf %18, %21 : vector<2x144xf32>
    %23 = math.exp %22 : vector<2x144xf32>
    %cst_15 = arith.constant 1.000000e+00 : f32
    %24 = vector.broadcast %cst_15 : f32 to vector<2x144xf32>
    %25 = arith.subf %23, %24 : vector<2x144xf32>
    %26 = arith.select %20, %18, %25 : vector<2x144xi1>, vector<2x144xf32>
    %c0_16 = arith.constant 0 : index
    %c0_17 = arith.constant 0 : index
    %27 = vector.load %arg6[%c0_16, %c0_17] : memref<4x144xf32, #tpu.memory_space<vmem>>, vector<4x144xf32>
    %cst_18 = arith.constant dense<0.000000e+00> : vector<4x2xf32>
    %28 = tpu.matmul %27, %26, %cst_18 {dimension_numbers = #tpu.dot_dimension_numbers<[1], [1], [0], [0], [0, 0, 1, 0], [], []>} : vector<4x144xf32>, vector<2x144xf32>, vector<4x2xf32> -> vector<4x2xf32>
    %c0_19 = arith.constant 0 : index
    %c0_20 = arith.constant 0 : index
    %29 = vector.load %arg7[%c0_19, %c0_20] : memref<4x1xf32, #tpu.memory_space<vmem>>, vector<4x1xf32>
    %30 = vector.broadcast %29 : vector<4x1xf32> to vector<4x2xf32>
    %31 = arith.addf %28, %30 : vector<4x2xf32>
    %cst_21 = arith.constant dense<0xFF800000> : vector<2xf32>
    %32 = vector.multi_reduction <maximumf>, %31, %cst_21 [0] : vector<4x2xf32> to vector<2xf32>
    %33 = vector.shape_cast %32 : vector<2xf32> to vector<1x2xf32>
    %34 = vector.broadcast %33 : vector<1x2xf32> to vector<4x2xf32>
    %35 = arith.subf %31, %34 : vector<4x2xf32>
    %36 = math.exp %35 : vector<4x2xf32>
    %cst_22 = arith.constant dense<0.000000e+00> : vector<2xf32>
    %37 = vector.multi_reduction <add>, %36, %cst_22 [0] : vector<4x2xf32> to vector<2xf32>
    %38 = vector.shape_cast %37 : vector<2xf32> to vector<1x2xf32>
    %39 = math.log %38 : vector<1x2xf32>
    %40 = vector.broadcast %39 : vector<1x2xf32> to vector<4x2xf32>
    %41 = arith.subf %35, %40 : vector<4x2xf32>
    %c0_23 = arith.constant 0 : index
    %c0_24 = arith.constant 0 : index
    %42 = vector.load %arg8[%c0_23, %c0_24] : memref<4x2xf32, #tpu.memory_space<vmem>>, vector<4x2xf32>
    tpu.vector_store %arg8[%c0_23, %c0_24], %41 {strides = array<i32>} : memref<4x2xf32, #tpu.memory_space<vmem>>, vector<4x2xf32>,
    return
  }
  func.func @transform_0(%arg0: i32) -> (i32, i32) {
    %c0_i32 = arith.constant 0 : i32
    %c0_i32_0 = arith.constant 0 : i32
    return %arg0, %c0_i32 : i32, i32
  }
  func.func @transform_1(%arg0: i32) -> (i32, i32) {
    %c0_i32 = arith.constant 0 : i32
    %c0_i32_0 = arith.constant 0 : i32
    %c0_i32_1 = arith.constant 0 : i32
    return %c0_i32, %c0_i32_0 : i32, i32
  }
  func.func @transform_2(%arg0: i32) -> (i32, i32) {
    %c0_i32 = arith.constant 0 : i32
    %c0_i32_0 = arith.constant 0 : i32
    %c0_i32_1 = arith.constant 0 : i32
    return %c0_i32, %c0_i32_0 : i32, i32
  }
  func.func @transform_3(%arg0: i32) -> (i32, i32) {
    %c0_i32 = arith.constant 0 : i32
    %c0_i32_0 = arith.constant 0 : i32
    %c0_i32_1 = arith.constant 0 : i32
    return %c0_i32, %c0_i32_0 : i32, i32
  }
  func.func @transform_4(%arg0: i32) -> (i32, i32) {
    %c0_i32 = arith.constant 0 : i32
    %c0_i32_0 = arith.constant 0 : i32
    %c0_i32_1 = arith.constant 0 : i32
    return %c0_i32, %c0_i32_0 : i32, i32
  }
  func.func @transform_5(%arg0: i32) -> (i32, i32) {
    %c0_i32 = arith.constant 0 : i32
    %c0_i32_0 = arith.constant 0 : i32
    %c0_i32_1 = arith.constant 0 : i32
    return %c0_i32, %c0_i32_0 : i32, i32
  }
  func.func @transform_6(%arg0: i32) -> (i32, i32) {
    %c0_i32 = arith.constant 0 : i32
    %c0_i32_0 = arith.constant 0 : i32
    %c0_i32_1 = arith.constant 0 : i32
    return %c0_i32, %c0_i32_0 : i32, i32
  }
  func.func @transform_7(%arg0: i32) -> (i32, i32) {
    %c0_i32 = arith.constant 0 : i32
    %c0_i32_0 = arith.constant 0 : i32
    return %c0_i32, %arg0 : i32, i32
  }
}

</mosaic_0001>

<llo_original>
// kernel: tpu_custom_call.1
$region0: #{tpu_custom_call.1}
  #allocation0 [shape = 'u32[]', space=smem, size = 0x4, offset = 0x4, fixed_abs, tag = 'smem constant byte address 0x4 - core index']
  #allocation1 [shape = 'u32[144,128]{1,0:T(1,128)}', space=vmem, size = 0x12000, scoped, tag = 'internal scratch']
  %s0 = inlined_call_operand.vmem [shape: f32[2,256], index: 0, kind: input, shape index: {}]
  %s1 = inlined_call_operand.vmem [shape: f32[256,528], index: 1, kind: input, shape index: {}]
  %s2 = inlined_call_operand.vmem [shape: f32[1,528], index: 2, kind: input, shape index: {}]
  %s3 = inlined_call_operand.vmem [shape: f32[528,144], index: 3, kind: input, shape index: {}]
  %s4 = inlined_call_operand.vmem [shape: f32[1,144], index: 4, kind: input, shape index: {}]
  %s5 = inlined_call_operand.vmem [shape: f32[4,144], index: 5, kind: input, shape index: {}]
  %s6 = inlined_call_operand.vmem [shape: f32[4,1], index: 6, kind: input, shape index: {}]
  %s7 = inlined_call_operand.vmem [shape: f32[4,2], index: 7, kind: output, shape index: {}]
  %s8 = sld [smem:[#allocation0]]
  $region38: #{tpu_custom_call.1} parent=0
    _
  %s10 = ssub.s32 1, %s8
  %s11 = scalar_select 0, %s10, %s8
  // Predicated region
  $region2: #{tpu_custom_call.1} parent=0 // pred_check
    _
  $region3: #{tpu_custom_call.1} parent=0 // pred_check_branch
    %13 = sbr.rel (0) target = $region5
  $region4: #{tpu_custom_call.1} parent=0 // pred_region
    _
  $region5: #{tpu_custom_call.1} parent=0 // pred_fallthru
    _
  // Predicated region
  $region6: #{tpu_custom_call.1} parent=0 // pred_check
    _
  $region7: #{tpu_custom_call.1} parent=0 // pred_check_branch
    %15 = sbr.rel (0) target = $region9
  $region8: #{tpu_custom_call.1} parent=0 // pred_region
    _
  $region9: #{tpu_custom_call.1} parent=0 // pred_fallthru
    _
  // Predicated region
  $region10: #{tpu_custom_call.1} parent=0 // pred_check
    _
  $region11: #{tpu_custom_call.1} parent=0 // pred_check_branch
    %17 = sbr.rel (0) target = $region13
  $region12: #{tpu_custom_call.1} parent=0 // pred_region
    _
  $region13: #{tpu_custom_call.1} parent=0 // pred_fallthru
    _
  // Predicated region
  $region14: #{tpu_custom_call.1} parent=0 // pred_check
    _
  $region15: #{tpu_custom_call.1} parent=0 // pred_check_branch
    %19 = sbr.rel (0) target = $region17
  $region16: #{tpu_custom_call.1} parent=0 // pred_region
    _
  $region17: #{tpu_custom_call.1} parent=0 // pred_fallthru
    _
  // Predicated region
  $region18: #{tpu_custom_call.1} parent=0 // pred_check
    _
  $region19: #{tpu_custom_call.1} parent=0 // pred_check_branch
    %21 = sbr.rel (0) target = $region21
  $region20: #{tpu_custom_call.1} parent=0 // pred_region
    _
  $region21: #{tpu_custom_call.1} parent=0 // pred_fallthru
    _
  // Predicated region
  $region22: #{tpu_custom_call.1} parent=0 // pred_check
    _
  $region23: #{tpu_custom_call.1} parent=0 // pred_check_branch
    %23 = sbr.rel (0) target = $region25
  $region24: #{tpu_custom_call.1} parent=0 // pred_region
    _
  $region25: #{tpu_custom_call.1} parent=0 // pred_fallthru
    _
  // Predicated region
  $region26: #{tpu_custom_call.1} parent=0 // pred_check
    _
  $region27: #{tpu_custom_call.1} parent=0 // pred_check_branch
    %25 = sbr.rel (0) target = $region29
  $region28: #{tpu_custom_call.1} parent=0 // pred_region
    _
  $region29: #{tpu_custom_call.1} parent=0 // pred_fallthru
    _
  %v26 = vld [vmem:[%s0] sm:$0xf]
  %v27 = vld [vmem:[%s1] sm:$0xff]
  %v28 = vld [vmem:[%s1 + $0x8] sm:$0xff]
  %v29 = vld [vmem:[%s1 + $0x10] sm:$0xff]
  %v30 = vld [vmem:[%s1 + $0x18] sm:$0xff]
  %v31 = vld [vmem:[%s1 + $0x20] sm:$0xff]
  %v32 = vld [vmem:[%s1 + $0x28] sm:$0xff]
  %v33 = vld [vmem:[%s1 + $0x30] sm:$0xff]
  %v34 = vld [vmem:[%s1 + $0x38] sm:$0xff]
  %v35 = vld [vmem:[%s1 + $0x40] sm:$0xff]
  %v36 = vld [vmem:[%s1 + $0x48] sm:$0xff]
  %v37 = vld [vmem:[%s1 + $0x50] sm:$0xff]
  %v38 = vld [vmem:[%s1 + $0x58] sm:$0xff]
  %v39 = vld [vmem:[%s1 + $0x60] sm:$0xff]
  %v40 = vld [vmem:[%s1 + $0x68] sm:$0xff]
  %v41 = vld [vmem:[%s1 + $0x70] sm:$0xff]
  %v42 = vld [vmem:[%s1 + $0x78] sm:$0xff]
  %v43 = vld [vmem:[%s1 + $0x80] sm:$0xff]
  %v44 = vld [vmem:[%s1 + $0x88] sm:$0xff]
  %v45 = vld [vmem:[%s1 + $0x90] sm:$0xff]
  %v46 = vld [vmem:[%s1 + $0x98] sm:$0xff]
  %v47 = vld [vmem:[%s1 + $0xa0] sm:$0xff]
  %v48 = vld [vmem:[%s1 + $0xa8] sm:$0xff]
  %v49 = vld [vmem:[%s1 + $0xb0] sm:$0xff]
  %v50 = vld [vmem:[%s1 + $0xb8] sm:$0xff]
  %v51 = vld [vmem:[%s1 + $0xc0] sm:$0xff]
  %v52 = vld [vmem:[%s1 + $0xc8] sm:$0xff]
  %v53 = vld [vmem:[%s1 + $0xd0] sm:$0xff]
  %v54 = vld [vmem:[%s1 + $0xd8] sm:$0xff]
  %v55 = vld [vmem:[%s1 + $0xe0] sm:$0xff]
  %v56 = vld [vmem:[%s1 + $0xe8] sm:$0xff]
  %v57 = vld [vmem:[%s1 + $0xf0] sm:$0xff]
  %v58 = vld [vmem:[%s1 + $0xf8] sm:$0xff]
  %v59 = vld [vmem:[%s1 + $0x100] sm:$0xff]
  %v60 = vld [vmem:[%s1 + $0x108] sm:$0xff]
  %v61 = vld [vmem:[%s1 + $0x110] sm:$0xff]
  %v62 = vld [vmem:[%s1 + $0x118] sm:$0xff]
  %v63 = vld [vmem:[%s1 + $0x120] sm:$0xff]
  %v64 = vld [vmem:[%s1 + $0x128] sm:$0xff]
  %v65 = vld [vmem:[%s1 + $0x130] sm:$0xff]
  %v66 = vld [vmem:[%s1 + $0x138] sm:$0xff]
  %v67 = vld [vmem:[%s1 + $0x140] sm:$0xff]
  %v68 = vld [vmem:[%s1 + $0x148] sm:$0xff]
  %v69 = vld [vmem:[%s1 + $0x150] sm:$0xff]
  %v70 = vld [vmem:[%s1 + $0x158] sm:$0xff]
  %v71 = vld [vmem:[%s1 + $0x160] sm:$0xff]
  %v72 = vld [vmem:[%s1 + $0x168] sm:$0xff]
  %v73 = vld [vmem:[%s1 + $0x170] sm:$0xff]
  %v74 = vld [vmem:[%s1 + $0x178] sm:$0xff]
  %v75 = vld [vmem:[%s1 + $0x180] sm:$0xff]
  %v76 = vld [vmem:[%s1 + $0x188] sm:$0xff]
  %v77 = vld [vmem:[%s1 + $0x190] sm:$0xff]
  %v78 = vld [vmem:[%s1 + $0x198] sm:$0xff]
  %v79 = vld [vmem:[%s1 + $0x1a0] sm:$0xff]
  %v80 = vld [vmem:[%s1 + $0x1a8] sm:$0xff]
  %v81 = vld [vmem:[%s1 + $0x1b0] sm:$0xff]
  %v82 = vld [vmem:[%s1 + $0x1b8] sm:$0xff]
  %v83 = vld [vmem:[%s1 + $0x1c0] sm:$0xff]
  %v84 = vld [vmem:[%s1 + $0x1c8] sm:$0xff]
  %v85 = vld [vmem:[%s1 + $0x1d0] sm:$0xff]
  %v86 = vld [vmem:[%s1 + $0x1d8] sm:$0xff]
  %v87 = vld [vmem:[%s1 + $0x1e0] sm:$0xff]
  %v88 = vld [vmem:[%s1 + $0x1e8] sm:$0xff]
  %v89 = vld [vmem:[%s1 + $0x1f0] sm:$0xff]
  %v90 = vld [vmem:[%s1 + $0x1f8] sm:$0xff]
  %v91 = vld [vmem:[%s1 + $0x200] sm:$0xff]
  %v92 = vld [vmem:[%s1 + $0x208] sm:$0xff]
  %v93 = vld [vmem:[%s1 + $0x210] sm:$0xff]
  %v94 = vld [vmem:[%s1 + $0x218] sm:$0xff]
  %v95 = vld [vmem:[%s1 + $0x220] sm:$0xff]
  %v96 = vld [vmem:[%s1 + $0x228] sm:$0xff]
  %v97 = vld [vmem:[%s1 + $0x230] sm:$0xff]
  %v98 = vld [vmem:[%s1 + $0x238] sm:$0xff]
  %v99 = vld [vmem:[%s1 + $0x240] sm:$0xff]
  %v100 = vld [vmem:[%s1 + $0x248] sm:$0xff]
  %v101 = vld [vmem:[%s1 + $0x250] sm:$0xff]
  %v102 = vld [vmem:[%s1 + $0x258] sm:$0xff]
  %v103 = vld [vmem:[%s1 + $0x260] sm:$0xff]
  %v104 = vld [vmem:[%s1 + $0x268] sm:$0xff]
  %v105 = vld [vmem:[%s1 + $0x270] sm:$0xff]
  %v106 = vld [vmem:[%s1 + $0x278] sm:$0xff]
  %v107 = vld [vmem:[%s1 + $0x280] sm:$0xff]
  %v108 = vld [vmem:[%s1 + $0x288] sm:$0xff]
  %v109 = vld [vmem:[%s1 + $0x290] sm:$0xff]
  %v110 = vld [vmem:[%s1 + $0x298] sm:$0xff]
  %v111 = vld [vmem:[%s1 + $0x2a0] sm:$0xff]
  %v112 = vld [vmem:[%s1 + $0x2a8] sm:$0xff]
  %v113 = vld [vmem:[%s1 + $0x2b0] sm:$0xff]
  %v114 = vld [vmem:[%s1 + $0x2b8] sm:$0xff]
  %v115 = vld [vmem:[%s1 + $0x2c0] sm:$0xff]
  %v116 = vld [vmem:[%s1 + $0x2c8] sm:$0xff]
  %v117 = vld [vmem:[%s1 + $0x2d0] sm:$0xff]
  %v118 = vld [vmem:[%s1 + $0x2d8] sm:$0xff]
  %v119 = vld [vmem:[%s1 + $0x2e0] sm:$0xff]
  %v120 = vld [vmem:[%s1 + $0x2e8] sm:$0xff]
  %v121 = vld [vmem:[%s1 + $0x2f0] sm:$0xff]
  %v122 = vld [vmem:[%s1 + $0x2f8] sm:$0xff]
  %v123 = vld [vmem:[%s1 + $0x300] sm:$0xff]
  %v124 = vld [vmem:[%s1 + $0x308] sm:$0xff]
  %v125 = vld [vmem:[%s1 + $0x310] sm:$0xff]
  %v126 = vld [vmem:[%s1 + $0x318] sm:$0xff]
  %v127 = vld [vmem:[%s1 + $0x320] sm:$0xff]
  %v128 = vld [vmem:[%s1 + $0x328] sm:$0xff]
  %v129 = vld [vmem:[%s1 + $0x330] sm:$0xff]
  %v130 = vld [vmem:[%s1 + $0x338] sm:$0xff]
  %v131 = vld [vmem:[%s1 + $0x340] sm:$0xff]
  %v132 = vld [vmem:[%s1 + $0x348] sm:$0xff]
  %v133 = vld [vmem:[%s1 + $0x350] sm:$0xff]
  %v134 = vld [vmem:[%s1 + $0x358] sm:$0xff]
  %v135 = vld [vmem:[%s1 + $0x360] sm:$0xff]
  %v136 = vld [vmem:[%s1 + $0x368] sm:$0xff]
  %v137 = vld [vmem:[%s1 + $0x370] sm:$0xff]
  %v138 = vld [vmem:[%s1 + $0x378] sm:$0xff]
  %v139 = vld [vmem:[%s1 + $0x380] sm:$0xff]
  %v140 = vld [vmem:[%s1 + $0x388] sm:$0xff]
  %v141 = vld [vmem:[%s1 + $0x390] sm:$0xff]
  %v142 = vld [vmem:[%s1 + $0x398] sm:$0xff]
  %v143 = vld [vmem:[%s1 + $0x3a0] sm:$0xff]
  %v144 = vld [vmem:[%s1 + $0x3a8] sm:$0xff]
  %v145 = vld [vmem:[%s1 + $0x3b0] sm:$0xff]
  %v146 = vld [vmem:[%s1 + $0x3b8] sm:$0xff]
  %v147 = vld [vmem:[%s1 + $0x3c0] sm:$0xff]
  %v148 = vld [vmem:[%s1 + $0x3c8] sm:$0xff]
  %v149 = vld [vmem:[%s1 + $0x3d0] sm:$0xff]
  %v150 = vld [vmem:[%s1 + $0x3d8] sm:$0xff]
  %v151 = vld [vmem:[%s1 + $0x3e0] sm:$0xff]
  %v152 = vld [vmem:[%s1 + $0x3e8] sm:$0xff]
  %v153 = vld [vmem:[%s1 + $0x3f0] sm:$0xff]
  %v154 = vld [vmem:[%s1 + $0x3f8] sm:$0xff]
  %v155 = vld [vmem:[%s1 + $0x400] sm:$0xff]
  %v156 = vld [vmem:[%s1 + $0x408] sm:$0xff]
  %v157 = vld [vmem:[%s1 + $0x410] sm:$0xff]
  %v158 = vld [vmem:[%s1 + $0x418] sm:$0xff]
  %v159 = vld [vmem:[%s1 + $0x420] sm:$0xff]
  %v160 = vld [vmem:[%s1 + $0x428] sm:$0xff]
  %v161 = vld [vmem:[%s1 + $0x430] sm:$0xff]
  %v162 = vld [vmem:[%s1 + $0x438] sm:$0xff]
  %v163 = vld [vmem:[%s1 + $0x440] sm:$0xff]
  %v164 = vld [vmem:[%s1 + $0x448] sm:$0xff]
  %v165 = vld [vmem:[%s1 + $0x450] sm:$0xff]
  %v166 = vld [vmem:[%s1 + $0x458] sm:$0xff]
  %v167 = vld [vmem:[%s1 + $0x460] sm:$0xff]
  %v168 = vld [vmem:[%s1 + $0x468] sm:$0xff]
  %v169 = vld [vmem:[%s1 + $0x470] sm:$0xff]
  %v170 = vld [vmem:[%s1 + $0x478] sm:$0xff]
  %v171 = vld [vmem:[%s1 + $0x480] sm:$0xff]
  %v172 = vld [vmem:[%s1 + $0x488] sm:$0xff]
  %v173 = vld [vmem:[%s1 + $0x490] sm:$0xff]
  %v174 = vld [vmem:[%s1 + $0x498] sm:$0xff]
  %v175 = vld [vmem:[%s1 + $0x4a0] sm:$0xff]
  %v176 = vld [vmem:[%s1 + $0x4a8] sm:$0xff]
  %v177 = vld [vmem:[%s1 + $0x4b0] sm:$0xff]
  %v178 = vld [vmem:[%s1 + $0x4b8] sm:$0xff]
  %v179 = vld [vmem:[%s1 + $0x4c0] sm:$0xff]
  %v180 = vld [vmem:[%s1 + $0x4c8] sm:$0xff]
  %v181 = vld [vmem:[%s1 + $0x4d0] sm:$0xff]
  %v182 = vld [vmem:[%s1 + $0x4d8] sm:$0xff]
  %v183 = vld [vmem:[%s1 + $0x4e0] sm:$0xff]
  %v184 = vld [vmem:[%s1 + $0x4e8] sm:$0xff]
  %v185 = vld [vmem:[%s1 + $0x4f0] sm:$0xff]
  %v186 = vld [vmem:[%s1 + $0x4f8] sm:$0xff]
  %v187 = vld [vmem:[%s2] sm:$0x1f]
  %v189 = vlaneseq
  %v190 = vshrl.u32 %v189, 7
  %v191 = vsub.s32 0, %v190
  %v192 = vrot.slane %v187, %v191
  %v193 = vlaneseq
  %v194 = vshrl.u32 %v193, 7
  %v195 = vsub.s32 1, %v194
  %v196 = vrot.slane %v187, %v195
  %v197 = vlaneseq
  %v198 = vshrl.u32 %v197, 7
  %v199 = vsub.s32 2, %v198
  %v200 = vrot.slane %v187, %v199
  %v201 = vlaneseq
  %v202 = vshrl.u32 %v201, 7
  %v203 = vsub.s32 3, %v202
  %v204 = vrot.slane %v187, %v203
  %v205 = vlaneseq
  %v206 = vshrl.u32 %v205, 7
  %v207 = vsub.s32 4, %v206
  %v208 = vrot.slane %v187, %v207
  %v216 = vunpack.c.l.s4 1983009808
  %v217 = vunpack.c.0.s8 %v216
  %v218 = vlaneseq
  %v219 = vshrl.u32 %v218, 7
  %v220 = vsub.s32 %v217, %v219
  %v221 = vrot.slane %v26, %v220
  %v222 = vcombine.high %v221, %v221
  %225 = vmatprep.subr.mxu0 %v28
  %226 = vmatpush1.msra.mxu0 %v27
  %227 = vmatprep.subr.mxu0 %v33
  %228 = vmatpush1.msra.mxu0 %v32
  %229 = vmatprep.subr.mxu0 %v38
  %230 = vmatpush1.msra.mxu0 %v37
  %231 = vmatprep.subr.mxu0 %v43
  %232 = vmatpush1.msra.mxu0 %v42
  %233 = vmatprep.subr.mxu0 %v48
  %234 = vmatpush1.msra.mxu0 %v47
  %235 = vmatprep.subr.mxu0 %v53
  %236 = vmatpush1.msra.mxu0 %v52
  %237 = vmatprep.subr.mxu0 %v58
  %238 = vmatpush1.msra.mxu0 %v57
  %239 = vmatprep.subr.mxu0 %v63
  %240 = vmatpush1.msra.mxu0 %v62
  %241 = vmatprep.subr.mxu0 %v68
  %242 = vmatpush1.msra.mxu0 %v67
  %243 = vmatprep.subr.mxu0 %v73
  %244 = vmatpush1.msra.mxu0 %v72
  %245 = vmatprep.subr.mxu0 %v78
  %246 = vmatpush1.msra.mxu0 %v77
  %247 = vmatprep.subr.mxu0 %v83
  %248 = vmatpush1.msra.mxu0 %v82
  %249 = vmatprep.subr.mxu0 %v88
  %250 = vmatpush1.msra.mxu0 %v87
  %251 = vmatprep.subr.mxu0 %v93
  %252 = vmatpush1.msra.mxu0 %v92
  %253 = vmatprep.subr.mxu0 %v98
  %254 = vmatpush1.msra.mxu0 %v97
  %255 = vmatprep.subr.mxu0 %v103
  %256 = vmatpush1.msra.mxu0 %v102
  %257 = vmatprep.subr.mxu0 %v108
  %258 = vmatpush1.msra.mxu0 %v107
  %259 = vmatprep.subr.mxu0 %v113
  %260 = vmatpush1.msra.mxu0 %v112
  %261 = vmatprep.subr.mxu0 %v118
  %262 = vmatpush1.msra.mxu0 %v117
  %263 = vmatprep.subr.mxu0 %v123
  %264 = vmatpush1.msra.mxu0 %v122
  %265 = vmatprep.subr.mxu0 %v128
  %266 = vmatpush1.msra.mxu0 %v127
  %267 = vmatprep.subr.mxu0 %v133
  %268 = vmatpush1.msra.mxu0 %v132
  %269 = vmatprep.subr.mxu0 %v138
  %270 = vmatpush1.msra.mxu0 %v137
  %271 = vmatprep.subr.mxu0 %v143
  %272 = vmatpush1.msra.mxu0 %v142
  %273 = vmatprep.subr.mxu0 %v148
  %274 = vmatpush1.msra.mxu0 %v147
  %275 = vmatprep.subr.mxu0 %v153
  %276 = vmatpush1.msra.mxu0 %v152
  %277 = vmatprep.subr.mxu0 %v158
  %278 = vmatpush1.msra.mxu0 %v157
  %279 = vmatprep.subr.mxu0 %v163
  %280 = vmatpush1.msra.mxu0 %v162
  %281 = vmatprep.subr.mxu0 %v168
  %282 = vmatpush1.msra.mxu0 %v167
  %283 = vmatprep.subr.mxu0 %v173
  %284 = vmatpush1.msra.mxu0 %v172
  %285 = vmatprep.subr.mxu0 %v178
  %286 = vmatpush1.msra.mxu0 %v177
  %287 = vmatprep.subr.mxu0 %v183
  %288 = vmatpush1.msra.mxu0 %v182
  %289 = vmatprep.mubr.f32.mxu0 %v222
  %290 = vmatmul.mubr.f32.gmra.mrb[0].mxu0 %v221
  %v291 = vpop.f32.mrb[0].mxu0
  %v292 = vadd.f32 %v192, %v291
  %v293 = vpop.f32.mrb[0].mxu0
  %v294 = vadd.f32 %v196, %v293
  %295 = vdwg.mxu0
  %296 = vmatprep.subr.mxu0 %v30
  %297 = vmatpush1.msra.mxu0 %v29
  %298 = vmatprep.subr.mxu0 %v35
  %299 = vmatpush1.msra.mxu0 %v34
  %300 = vmatprep.subr.mxu0 %v40
  %301 = vmatpush1.msra.mxu0 %v39
  %302 = vmatprep.subr.mxu0 %v45
  %303 = vmatpush1.msra.mxu0 %v44
  %304 = vmatprep.subr.mxu0 %v50
  %305 = vmatpush1.msra.mxu0 %v49
  %306 = vmatprep.subr.mxu0 %v55
  %307 = vmatpush1.msra.mxu0 %v54
  %308 = vmatprep.subr.mxu0 %v60
  %309 = vmatpush1.msra.mxu0 %v59
  %310 = vmatprep.subr.mxu0 %v65
  %311 = vmatpush1.msra.mxu0 %v64
  %312 = vmatprep.subr.mxu0 %v70
  %313 = vmatpush1.msra.mxu0 %v69
  %314 = vmatprep.subr.mxu0 %v75
  %315 = vmatpush1.msra.mxu0 %v74
  %316 = vmatprep.subr.mxu0 %v80
  %317 = vmatpush1.msra.mxu0 %v79
  %318 = vmatprep.subr.mxu0 %v85
  %319 = vmatpush1.msra.mxu0 %v84
  %320 = vmatprep.subr.mxu0 %v90
  %321 = vmatpush1.msra.mxu0 %v89
  %322 = vmatprep.subr.mxu0 %v95
  %323 = vmatpush1.msra.mxu0 %v94
  %324 = vmatprep.subr.mxu0 %v100
  %325 = vmatpush1.msra.mxu0 %v99
  %326 = vmatprep.subr.mxu0 %v105
  %327 = vmatpush1.msra.mxu0 %v104
  %328 = vmatprep.subr.mxu0 %v110
  %329 = vmatpush1.msra.mxu0 %v109
  %330 = vmatprep.subr.mxu0 %v115
  %331 = vmatpush1.msra.mxu0 %v114
  %332 = vmatprep.subr.mxu0 %v120
  %333 = vmatpush1.msra.mxu0 %v119
  %334 = vmatprep.subr.mxu0 %v125
  %335 = vmatpush1.msra.mxu0 %v124
  %336 = vmatprep.subr.mxu0 %v130
  %337 = vmatpush1.msra.mxu0 %v129
  %338 = vmatprep.subr.mxu0 %v135
  %339 = vmatpush1.msra.mxu0 %v134
  %340 = vmatprep.subr.mxu0 %v140
  %341 = vmatpush1.msra.mxu0 %v139
  %342 = vmatprep.subr.mxu0 %v145
  %343 = vmatpush1.msra.mxu0 %v144
  %344 = vmatprep.subr.mxu0 %v150
  %345 = vmatpush1.msra.mxu0 %v149
  %346 = vmatprep.subr.mxu0 %v155
  %347 = vmatpush1.msra.mxu0 %v154
  %348 = vmatprep.subr.mxu0 %v160
  %349 = vmatpush1.msra.mxu0 %v159
  %350 = vmatprep.subr.mxu0 %v165
  %351 = vmatpush1.msra.mxu0 %v164
  %352 = vmatprep.subr.mxu0 %v170
  %353 = vmatpush1.msra.mxu0 %v169
  %354 = vmatprep.subr.mxu0 %v175
  %355 = vmatpush1.msra.mxu0 %v174
  %356 = vmatprep.subr.mxu0 %v180
  %357 = vmatpush1.msra.mxu0 %v179
  %358 = vmatprep.subr.mxu0 %v185
  %359 = vmatpush1.msra.mxu0 %v184
  %360 = vmatprep.mubr.f32.mxu0 %v222
  %361 = vmatmul.mubr.f32.gmra.mrb[0].mxu0 %v221
  %v362 = vpop.f32.mrb[0].mxu0
  %v363 = vadd.f32 %v200, %v362
  %v364 = vpop.f32.mrb[0].mxu0
  %v365 = vadd.f32 %v204, %v364
  %366 = vdwg.mxu0
  %367 = vmatprep.subr.mxu0 0.0
  %368 = vmatpush1.msra.mxu0 %v31
  %369 = vmatprep.subr.mxu0 0.0
  %370 = vmatpush1.msra.mxu0 %v36
  %371 = vmatprep.subr.mxu0 0.0
  %372 = vmatpush1.msra.mxu0 %v41
  %373 = vmatprep.subr.mxu0 0.0
  %374 = vmatpush1.msra.mxu0 %v46
  %375 = vmatprep.subr.mxu0 0.0
  %376 = vmatpush1.msra.mxu0 %v51
  %377 = vmatprep.subr.mxu0 0.0
  %378 = vmatpush1.msra.mxu0 %v56
  %379 = vmatprep.subr.mxu0 0.0
  %380 = vmatpush1.msra.mxu0 %v61
  %381 = vmatprep.subr.mxu0 0.0
  %382 = vmatpush1.msra.mxu0 %v66
  %383 = vmatprep.subr.mxu0 0.0
  %384 = vmatpush1.msra.mxu0 %v71
  %385 = vmatprep.subr.mxu0 0.0
  %386 = vmatpush1.msra.mxu0 %v76
  %387 = vmatprep.subr.mxu0 0.0
  %388 = vmatpush1.msra.mxu0 %v81
  %389 = vmatprep.subr.mxu0 0.0
  %390 = vmatpush1.msra.mxu0 %v86
  %391 = vmatprep.subr.mxu0 0.0
  %392 = vmatpush1.msra.mxu0 %v91
  %393 = vmatprep.subr.mxu0 0.0
  %394 = vmatpush1.msra.mxu0 %v96
  %395 = vmatprep.subr.mxu0 0.0
  %396 = vmatpush1.msra.mxu0 %v101
  %397 = vmatprep.subr.mxu0 0.0
  %398 = vmatpush1.msra.mxu0 %v106
  %399 = vmatprep.subr.mxu0 0.0
  %400 = vmatpush1.msra.mxu0 %v111
  %401 = vmatprep.subr.mxu0 0.0
  %402 = vmatpush1.msra.mxu0 %v116
  %403 = vmatprep.subr.mxu0 0.0
  %404 = vmatpush1.msra.mxu0 %v121
  %405 = vmatprep.subr.mxu0 0.0
  %406 = vmatpush1.msra.mxu0 %v126
  %407 = vmatprep.subr.mxu0 0.0
  %408 = vmatpush1.msra.mxu0 %v131
  %409 = vmatprep.subr.mxu0 0.0
  %410 = vmatpush1.msra.mxu0 %v136
  %411 = vmatprep.subr.mxu0 0.0
  %412 = vmatpush1.msra.mxu0 %v141
  %413 = vmatprep.subr.mxu0 0.0
  %414 = vmatpush1.msra.mxu0 %v146
  %415 = vmatprep.subr.mxu0 0.0
  %416 = vmatpush1.msra.mxu0 %v151
  %417 = vmatprep.subr.mxu0 0.0
  %418 = vmatpush1.msra.mxu0 %v156
  %419 = vmatprep.subr.mxu0 0.0
  %420 = vmatpush1.msra.mxu0 %v161
  %421 = vmatprep.subr.mxu0 0.0
  %422 = vmatpush1.msra.mxu0 %v166
  %423 = vmatprep.subr.mxu0 0.0
  %424 = vmatpush1.msra.mxu0 %v171
  %425 = vmatprep.subr.mxu0 0.0
  %426 = vmatpush1.msra.mxu0 %v176
  %427 = vmatprep.subr.mxu0 0.0
  %428 = vmatpush1.msra.mxu0 %v181
  %429 = vmatprep.subr.mxu0 0.0
  %430 = vmatpush1.msra.mxu0 %v186
  %431 = vmatprep.mubr.f32.mxu0 %v222
  %432 = vmatmul.mubr.f32.gmra.mrb[0].mxu0 %v221
  %v433 = vpop.f32.mrb[0].mxu0
  %v434 = vadd.f32 %v208, %v433
  %v435 = vpop.f32.mrb[0].mxu0
  %436 = vdwg.mxu0
  %vm437 = vcmp.gt.f32.partialorder %v292, 0.0
  %vm438 = vcmp.gt.f32.partialorder %v294, 0.0
  %vm439 = vcmp.gt.f32.partialorder %v363, 0.0
  %vm440 = vcmp.gt.f32.partialorder %v365, 0.0
  %vm441 = vcmp.gt.f32.partialorder %v434, 0.0
  %v442 = vmin.f32 %v292, 0.0
  %v443 = vmin.f32 %v294, 0.0
  %v444 = vmin.f32 %v363, 0.0
  %v445 = vmin.f32 %v365, 0.0
  %v446 = vmin.f32 %v434, 0.0
  %v447 = vmul.f32 %v442, 1.442695
  %v448 = vpow.pop %v447
  %v449 = vmul.f32 %v443, 1.442695
  %v450 = vpow.pop %v449
  %v451 = vmul.f32 %v444, 1.442695
  %v452 = vpow.pop %v451
  %v453 = vmul.f32 %v445, 1.442695
  %v454 = vpow.pop %v453
  %v455 = vmul.f32 %v446, 1.442695
  %v456 = vpow.pop %v455
  %v457 = vsub.f32 %v448, 1.0
  %v458 = vsub.f32 %v450, 1.0
  %v459 = vsub.f32 %v452, 1.0
  %v460 = vsub.f32 %v454, 1.0
  %v461 = vsub.f32 %v456, 1.0
  %v462 = vsel %vm437, %v292, %v457
  %v463 = vsel %vm438, %v294, %v458
  %v464 = vsel %vm439, %v363, %v459
  %v465 = vsel %vm440, %v365, %v460
  %v466 = vsel %vm441, %v434, %v461
  %v467 = vld [vmem:[%s3] sm:$0xff]
  %v468 = vld [vmem:[%s3 + $0x8] sm:$0xff]
  %v469 = vld [vmem:[%s3 + $0x10] sm:$0xff]
  %v470 = vld [vmem:[%s3 + $0x18] sm:$0xff]
  %v471 = vld [vmem:[%s3 + $0x20] sm:$0xff]
  %v472 = vld [vmem:[%s3 + $0x28] sm:$0xff]
  %v473 = vld [vmem:[%s3 + $0x30] sm:$0xff]
  %v474 = vld [vmem:[%s3 + $0x38] sm:$0xff]
  %v475 = vld [vmem:[%s3 + $0x40] sm:$0xff]
  %v476 = vld [vmem:[%s3 + $0x48] sm:$0xff]
  %v477 = vld [vmem:[%s3 + $0x50] sm:$0xff]
  %v478 = vld [vmem:[%s3 + $0x58] sm:$0xff]
  %v479 = vld [vmem:[%s3 + $0x60] sm:$0xff]
  %v480 = vld [vmem:[%s3 + $0x68] sm:$0xff]
  %v481 = vld [vmem:[%s3 + $0x70] sm:$0xff]
  %v482 = vld [vmem:[%s3 + $0x78] sm:$0xff]
  %v483 = vld [vmem:[%s3 + $0x80] sm:$0xff]
  %v484 = vld [vmem:[%s3 + $0x88] sm:$0xff]
  %v485 = vld [vmem:[%s3 + $0x90] sm:$0xff]
  %v486 = vld [vmem:[%s3 + $0x98] sm:$0xff]
  %v487 = vld [vmem:[%s3 + $0xa0] sm:$0xff]
  %v488 = vld [vmem:[%s3 + $0xa8] sm:$0xff]
  %v489 = vld [vmem:[%s3 + $0xb0] sm:$0xff]
  %v490 = vld [vmem:[%s3 + $0xb8] sm:$0xff]
  %v491 = vld [vmem:[%s3 + $0xc0] sm:$0xff]
  %v492 = vld [vmem:[%s3 + $0xc8] sm:$0xff]
  %v493 = vld [vmem:[%s3 + $0xd0] sm:$0xff]
  %v494 = vld [vmem:[%s3 + $0xd8] sm:$0xff]
  %v495 = vld [vmem:[%s3 + $0xe0] sm:$0xff]
  %v496 = vld [vmem:[%s3 + $0xe8] sm:$0xff]
  %v497 = vld [vmem:[%s3 + $0xf0] sm:$0xff]
  %v498 = vld [vmem:[%s3 + $0xf8] sm:$0xff]
  %v499 = vld [vmem:[%s3 + $0x100] sm:$0xff]
  %v500 = vld [vmem:[%s3 + $0x108] sm:$0xff]
  %v501 = vld [vmem:[%s3 + $0x110] sm:$0xff]
  %v502 = vld [vmem:[%s3 + $0x118] sm:$0xff]
  %v503 = vld [vmem:[%s3 + $0x120] sm:$0xff]
  %v504 = vld [vmem:[%s3 + $0x128] sm:$0xff]
  %v505 = vld [vmem:[%s3 + $0x130] sm:$0xff]
  %v506 = vld [vmem:[%s3 + $0x138] sm:$0xff]
  %v507 = vld [vmem:[%s3 + $0x140] sm:$0xff]
  %v508 = vld [vmem:[%s3 + $0x148] sm:$0xff]
  %v509 = vld [vmem:[%s3 + $0x150] sm:$0xff]
  %v510 = vld [vmem:[%s3 + $0x158] sm:$0xff]
  %v511 = vld [vmem:[%s3 + $0x160] sm:$0xff]
  %v512 = vld [vmem:[%s3 + $0x168] sm:$0xff]
  %v513 = vld [vmem:[%s3 + $0x170] sm:$0xff]
  %v514 = vld [vmem:[%s3 + $0x178] sm:$0xff]
  %v515 = vld [vmem:[%s3 + $0x180] sm:$0xff]
  %v516 = vld [vmem:[%s3 + $0x188] sm:$0xff]
  %v517 = vld [vmem:[%s3 + $0x190] sm:$0xff]
  %v518 = vld [vmem:[%s3 + $0x198] sm:$0xff]
  %v519 = vld [vmem:[%s3 + $0x1a0] sm:$0xff]
  %v520 = vld [vmem:[%s3 + $0x1a8] sm:$0xff]
  %v521 = vld [vmem:[%s3 + $0x1b0] sm:$0xff]
  %v522 = vld [vmem:[%s3 + $0x1b8] sm:$0xff]
  %v523 = vld [vmem:[%s3 + $0x1c0] sm:$0xff]
  %v524 = vld [vmem:[%s3 + $0x1c8] sm:$0xff]
  %v525 = vld [vmem:[%s3 + $0x1d0] sm:$0xff]
  %v526 = vld [vmem:[%s3 + $0x1d8] sm:$0xff]
  %v527 = vld [vmem:[%s3 + $0x1e0] sm:$0xff]
  %v528 = vld [vmem:[%s3 + $0x1e8] sm:$0xff]
  %v529 = vld [vmem:[%s3 + $0x1f0] sm:$0xff]
  %v530 = vld [vmem:[%s3 + $0x1f8] sm:$0xff]
  %v531 = vld [vmem:[%s3 + $0x200] sm:$0xff]
  %v532 = vld [vmem:[%s3 + $0x208] sm:$0xff]
  %v533 = vld [vmem:[%s3 + $0x210] sm:$0xff]
  %v534 = vld [vmem:[%s3 + $0x218] sm:$0xff]
  %v535 = vld [vmem:[%s3 + $0x220] sm:$0xff]
  %v536 = vld [vmem:[%s3 + $0x228] sm:$0xff]
  %v537 = vld [vmem:[%s3 + $0x230] sm:$0xff]
  %v538 = vld [vmem:[%s3 + $0x238] sm:$0xff]
  %v539 = vld [vmem:[%s3 + $0x240] sm:$0xff]
  %v540 = vld [vmem:[%s3 + $0x248] sm:$0xff]
  %v541 = vld [vmem:[%s3 + $0x250] sm:$0xff]
  %v542 = vld [vmem:[%s3 + $0x258] sm:$0xff]
  %v543 = vld [vmem:[%s3 + $0x260] sm:$0xff]
  %v544 = vld [vmem:[%s3 + $0x268] sm:$0xff]
  %v545 = vld [vmem:[%s3 + $0x270] sm:$0xff]
  %v546 = vld [vmem:[%s3 + $0x278] sm:$0xff]
  %v547 = vld [vmem:[%s3 + $0x280] sm:$0xff]
  %v548 = vld [vmem:[%s3 + $0x288] sm:$0xff]
  %v549 = vld [vmem:[%s3 + $0x290] sm:$0xff]
  %v550 = vld [vmem:[%s3 + $0x298] sm:$0xff]
  %v551 = vld [vmem:[%s3 + $0x2a0] sm:$0xff]
  %v552 = vld [vmem:[%s3 + $0x2a8] sm:$0xff]
  %v553 = vld [vmem:[%s3 + $0x2b0] sm:$0xff]
  %v554 = vld [vmem:[%s3 + $0x2b8] sm:$0xff]
  %v555 = vld [vmem:[%s3 + $0x2c0] sm:$0xff]
  %v556 = vld [vmem:[%s3 + $0x2c8] sm:$0xff]
  %v557 = vld [vmem:[%s3 + $0x2d0] sm:$0xff]
  %v558 = vld [vmem:[%s3 + $0x2d8] sm:$0xff]
  %v559 = vld [vmem:[%s3 + $0x2e0] sm:$0xff]
  %v560 = vld [vmem:[%s3 + $0x2e8] sm:$0xff]
  %v561 = vld [vmem:[%s3 + $0x2f0] sm:$0xff]
  %v562 = vld [vmem:[%s3 + $0x2f8] sm:$0xff]
  %v563 = vld [vmem:[%s3 + $0x300] sm:$0xff]
  %v564 = vld [vmem:[%s3 + $0x308] sm:$0xff]
  %v565 = vld [vmem:[%s3 + $0x310] sm:$0xff]
  %v566 = vld [vmem:[%s3 + $0x318] sm:$0xff]
  %v567 = vld [vmem:[%s3 + $0x320] sm:$0xff]
  %v568 = vld [vmem:[%s3 + $0x328] sm:$0xff]
  %v569 = vld [vmem:[%s3 + $0x330] sm:$0xff]
  %v570 = vld [vmem:[%s3 + $0x338] sm:$0xff]
  %v571 = vld [vmem:[%s3 + $0x340] sm:$0xff]
  %v572 = vld [vmem:[%s3 + $0x348] sm:$0xff]
  %v573 = vld [vmem:[%s3 + $0x350] sm:$0xff]
  %v574 = vld [vmem:[%s3 + $0x358] sm:$0xff]
  %v575 = vld [vmem:[%s3 + $0x360] sm:$0xff]
  %v576 = vld [vmem:[%s3 + $0x368] sm:$0xff]
  %v577 = vld [vmem:[%s3 + $0x370] sm:$0xff]
  %v578 = vld [vmem:[%s3 + $0x378] sm:$0xff]
  %v579 = vld [vmem:[%s3 + $0x380] sm:$0xff]
  %v580 = vld [vmem:[%s3 + $0x388] sm:$0xff]
  %v581 = vld [vmem:[%s3 + $0x390] sm:$0xff]
  %v582 = vld [vmem:[%s3 + $0x398] sm:$0xff]
  %v583 = vld [vmem:[%s3 + $0x3a0] sm:$0xff]
  %v584 = vld [vmem:[%s3 + $0x3a8] sm:$0xff]
  %v585 = vld [vmem:[%s3 + $0x3b0] sm:$0xff]
  %v586 = vld [vmem:[%s3 + $0x3b8] sm:$0xff]
  %v587 = vld [vmem:[%s3 + $0x3c0] sm:$0xff]
  %v588 = vld [vmem:[%s3 + $0x3c8] sm:$0xff]
  %v589 = vld [vmem:[%s3 + $0x3d0] sm:$0xff]
  %v590 = vld [vmem:[%s3 + $0x3d8] sm:$0xff]
  %v591 = vld [vmem:[%s3 + $0x3e0] sm:$0xff]
  %v592 = vld [vmem:[%s3 + $0x3e8] sm:$0xff]
  %v593 = vld [vmem:[%s3 + $0x3f0] sm:$0xff]
  %v594 = vld [vmem:[%s3 + $0x3f8] sm:$0xff]
  %v595 = vld [vmem:[%s3 + $0x400] sm:$0xff]
  %v596 = vld [vmem:[%s3 + $0x408] sm:$0xff]
  %v597 = vld [vmem:[%s3 + $0x410] sm:$0xff]
  %v598 = vld [vmem:[%s3 + $0x418] sm:$0xff]
  %v599 = vld [vmem:[%s4] sm:$0x3]
  %v601 = vlaneseq
  %v602 = vshrl.u32 %v601, 7
  %v603 = vsub.s32 0, %v602
  %v604 = vrot.slane %v599, %v603
  %v605 = vlaneseq
  %v606 = vshrl.u32 %v605, 7
  %v607 = vsub.s32 1, %v606
  %v608 = vrot.slane %v599, %v607
  %vm611 = vcmask 130048
  %v613 = vsel %vm611, %v466, 0
  %615 = vmatprep.subr.mxu0 %v468
  %616 = vmatpush1.msra.mxu0 %v467
  %617 = vmatprep.subr.mxu0 %v470
  %618 = vmatpush1.msra.mxu0 %v469
  %619 = vmatprep.subr.mxu0 %v472
  %620 = vmatpush1.msra.mxu0 %v471
  %621 = vmatprep.subr.mxu0 %v474
  %622 = vmatpush1.msra.mxu0 %v473
  %623 = vmatprep.subr.mxu0 %v476
  %624 = vmatpush1.msra.mxu0 %v475
  %625 = vmatprep.subr.mxu0 %v478
  %626 = vmatpush1.msra.mxu0 %v477
  %627 = vmatprep.subr.mxu0 %v480
  %628 = vmatpush1.msra.mxu0 %v479
  %629 = vmatprep.subr.mxu0 %v482
  %630 = vmatpush1.msra.mxu0 %v481
  %631 = vmatprep.subr.mxu0 %v484
  %632 = vmatpush1.msra.mxu0 %v483
  %633 = vmatprep.subr.mxu0 %v486
  %634 = vmatpush1.msra.mxu0 %v485
  %635 = vmatprep.subr.mxu0 %v488
  %636 = vmatpush1.msra.mxu0 %v487
  %637 = vmatprep.subr.mxu0 %v490
  %638 = vmatpush1.msra.mxu0 %v489
  %639 = vmatprep.subr.mxu0 %v492
  %640 = vmatpush1.msra.mxu0 %v491
  %641 = vmatprep.subr.mxu0 %v494
  %642 = vmatpush1.msra.mxu0 %v493
  %643 = vmatprep.subr.mxu0 %v496
  %644 = vmatpush1.msra.mxu0 %v495
  %645 = vmatprep.subr.mxu0 %v498
  %646 = vmatpush1.msra.mxu0 %v497
  %647 = vmatprep.subr.mxu0 %v500
  %648 = vmatpush1.msra.mxu0 %v499
  %649 = vmatprep.subr.mxu0 %v502
  %650 = vmatpush1.msra.mxu0 %v501
  %651 = vmatprep.subr.mxu0 %v504
  %652 = vmatpush1.msra.mxu0 %v503
  %653 = vmatprep.subr.mxu0 %v506
  %654 = vmatpush1.msra.mxu0 %v505
  %655 = vmatprep.subr.mxu0 %v508
  %656 = vmatpush1.msra.mxu0 %v507
  %657 = vmatprep.subr.mxu0 %v510
  %658 = vmatpush1.msra.mxu0 %v509
  %659 = vmatprep.subr.mxu0 %v512
  %660 = vmatpush1.msra.mxu0 %v511
  %661 = vmatprep.subr.mxu0 %v514
  %662 = vmatpush1.msra.mxu0 %v513
  %663 = vmatprep.subr.mxu0 %v516
  %664 = vmatpush1.msra.mxu0 %v515
  %665 = vmatprep.subr.mxu0 %v518
  %666 = vmatpush1.msra.mxu0 %v517
  %667 = vmatprep.subr.mxu0 %v520
  %668 = vmatpush1.msra.mxu0 %v519
  %669 = vmatprep.subr.mxu0 %v522
  %670 = vmatpush1.msra.mxu0 %v521
  %671 = vmatprep.subr.mxu0 %v524
  %672 = vmatpush1.msra.mxu0 %v523
  %673 = vmatprep.subr.mxu0 %v526
  %674 = vmatpush1.msra.mxu0 %v525
  %675 = vmatprep.subr.mxu0 %v528
  %676 = vmatpush1.msra.mxu0 %v527
  %677 = vmatprep.subr.mxu0 %v530
  %678 = vmatpush1.msra.mxu0 %v529
  %679 = vmatprep.mubr.f32.mxu0 %v463
  %680 = vmatmul.mubr.f32.gmra.mrb[0].mxu0 %v462
  %v681 = vpop.f32.mrb[0].mxu0
  %v682 = vadd.f32 %v604, %v681
  %v683 = vpop.f32.mrb[0].mxu0
  %v684 = vadd.f32 %v608, %v683
  %685 = vdwg.mxu0
  %686 = vmatprep.subr.mxu0 %v532
  %687 = vmatpush1.msra.mxu0 %v531
  %688 = vmatprep.subr.mxu0 %v534
  %689 = vmatpush1.msra.mxu0 %v533
  %690 = vmatprep.subr.mxu0 %v536
  %691 = vmatpush1.msra.mxu0 %v535
  %692 = vmatprep.subr.mxu0 %v538
  %693 = vmatpush1.msra.mxu0 %v537
  %694 = vmatprep.subr.mxu0 %v540
  %695 = vmatpush1.msra.mxu0 %v539
  %696 = vmatprep.subr.mxu0 %v542
  %697 = vmatpush1.msra.mxu0 %v541
  %698 = vmatprep.subr.mxu0 %v544
  %699 = vmatpush1.msra.mxu0 %v543
  %700 = vmatprep.subr.mxu0 %v546
  %701 = vmatpush1.msra.mxu0 %v545
  %702 = vmatprep.subr.mxu0 %v548
  %703 = vmatpush1.msra.mxu0 %v547
  %704 = vmatprep.subr.mxu0 %v550
  %705 = vmatpush1.msra.mxu0 %v549
  %706 = vmatprep.subr.mxu0 %v552
  %707 = vmatpush1.msra.mxu0 %v551
  %708 = vmatprep.subr.mxu0 %v554
  %709 = vmatpush1.msra.mxu0 %v553
  %710 = vmatprep.subr.mxu0 %v556
  %711 = vmatpush1.msra.mxu0 %v555
  %712 = vmatprep.subr.mxu0 %v558
  %713 = vmatpush1.msra.mxu0 %v557
  %714 = vmatprep.subr.mxu0 %v560
  %715 = vmatpush1.msra.mxu0 %v559
  %716 = vmatprep.subr.mxu0 %v562
  %717 = vmatpush1.msra.mxu0 %v561
  %718 = vmatprep.subr.mxu0 %v564
  %719 = vmatpush1.msra.mxu0 %v563
  %720 = vmatprep.subr.mxu0 %v566
  %721 = vmatpush1.msra.mxu0 %v565
  %722 = vmatprep.subr.mxu0 %v568
  %723 = vmatpush1.msra.mxu0 %v567
  %724 = vmatprep.subr.mxu0 %v570
  %725 = vmatpush1.msra.mxu0 %v569
  %726 = vmatprep.subr.mxu0 %v572
  %727 = vmatpush1.msra.mxu0 %v571
  %728 = vmatprep.subr.mxu0 %v574
  %729 = vmatpush1.msra.mxu0 %v573
  %730 = vmatprep.subr.mxu0 %v576
  %731 = vmatpush1.msra.mxu0 %v575
  %732 = vmatprep.subr.mxu0 %v578
  %733 = vmatpush1.msra.mxu0 %v577
  %734 = vmatprep.subr.mxu0 %v580
  %735 = vmatpush1.msra.mxu0 %v579
  %736 = vmatprep.subr.mxu0 %v582
  %737 = vmatpush1.msra.mxu0 %v581
  %738 = vmatprep.subr.mxu0 %v584
  %739 = vmatpush1.msra.mxu0 %v583
  %740 = vmatprep.subr.mxu0 %v586
  %741 = vmatpush1.msra.mxu0 %v585
  %742 = vmatprep.subr.mxu0 %v588
  %743 = vmatpush1.msra.mxu0 %v587
  %744 = vmatprep.subr.mxu0 %v590
  %745 = vmatpush1.msra.mxu0 %v589
  %746 = vmatprep.subr.mxu0 %v592
  %747 = vmatpush1.msra.mxu0 %v591
  %748 = vmatprep.subr.mxu0 %v594
  %749 = vmatpush1.msra.mxu0 %v593
  %750 = vmatprep.mubr.f32.mxu0 %v465
  %751 = vmatmul.mubr.f32.gmra.mrb[0].mxu0 %v464
  %v752 = vpop.f32.mrb[0].mxu0
  %v753 = vadd.f32 %v682, %v752
  %v754 = vpop.f32.mrb[0].mxu0
  %v755 = vadd.f32 %v684, %v754
  %756 = vdwg.mxu0
  %757 = vmatprep.subr.mxu0 %v596
  %758 = vmatpush1.msra.mxu0 %v595
  %759 = vmatprep.subr.mxu0 %v598
  %760 = vmatpush1.msra.mxu0 %v597
  %761 = vmatprep.subr.mxu0 0.0
  %762 = vmatpush1.msra.mxu0 0.0
  %763 = vmatprep.subr.mxu0 0.0
  %764 = vmatpush1.msra.mxu0 0.0
  %765 = vmatprep.subr.mxu0 0.0
  %766 = vmatpush1.msra.mxu0 0.0
  %767 = vmatprep.subr.mxu0 0.0
  %768 = vmatpush1.msra.mxu0 0.0
  %769 = vmatprep.subr.mxu0 0.0
  %770 = vmatpush1.msra.mxu0 0.0
  %771 = vmatprep.subr.mxu0 0.0
  %772 = vmatpush1.msra.mxu0 0.0
  %773 = vmatprep.subr.mxu0 0.0
  %774 = vmatpush1.msra.mxu0 0.0
  %775 = vmatprep.subr.mxu0 0.0
  %776 = vmatpush1.msra.mxu0 0.0
  %777 = vmatprep.subr.mxu0 0.0
  %778 = vmatpush1.msra.mxu0 0.0
  %779 = vmatprep.subr.mxu0 0.0
  %780 = vmatpush1.msra.mxu0 0.0
  %781 = vmatprep.subr.mxu0 0.0
  %782 = vmatpush1.msra.mxu0 0.0
  %783 = vmatprep.subr.mxu0 0.0
  %784 = vmatpush1.msra.mxu0 0.0
  %785 = vmatprep.subr.mxu0 0.0
  %786 = vmatpush1.msra.mxu0 0.0
  %787 = vmatprep.subr.mxu0 0.0
  %788 = vmatpush1.msra.mxu0 0.0
  %789 = vmatprep.subr.mxu0 0.0
  %790 = vmatpush1.msra.mxu0 0.0
  %791 = vmatprep.subr.mxu0 0.0
  %792 = vmatpush1.msra.mxu0 0.0
  %793 = vmatprep.subr.mxu0 0.0
  %794 = vmatpush1.msra.mxu0 0.0
  %795 = vmatprep.subr.mxu0 0.0
  %796 = vmatpush1.msra.mxu0 0.0
  %797 = vmatprep.subr.mxu0 0.0
  %798 = vmatpush1.msra.mxu0 0.0
  %799 = vmatprep.subr.mxu0 0.0
  %800 = vmatpush1.msra.mxu0 0.0
  %801 = vmatprep.subr.mxu0 0.0
  %802 = vmatpush1.msra.mxu0 0.0
  %803 = vmatprep.subr.mxu0 0.0
  %804 = vmatpush1.msra.mxu0 0.0
  %805 = vmatprep.subr.mxu0 0.0
  %806 = vmatpush1.msra.mxu0 0.0
  %807 = vmatprep.subr.mxu0 0.0
  %808 = vmatpush1.msra.mxu0 0.0
  %809 = vmatprep.subr.mxu0 0.0
  %810 = vmatpush1.msra.mxu0 0.0
  %811 = vmatprep.subr.mxu0 0.0
  %812 = vmatpush1.msra.mxu0 0.0
  %813 = vmatprep.subr.mxu0 0.0
  %814 = vmatpush1.msra.mxu0 0.0
  %815 = vmatprep.subr.mxu0 0.0
  %816 = vmatpush1.msra.mxu0 0.0
  %817 = vmatprep.subr.mxu0 0.0
  %818 = vmatpush1.msra.mxu0 0.0
  %819 = vmatprep.subr.mxu0 0.0
  %820 = vmatpush1.msra.mxu0 0.0
  %821 = vmatprep.mubr.f32.mxu0 0.0
  %822 = vmatmul.mubr.f32.gmra.mrb[0].mxu0 %v613
  %v823 = vpop.f32.mrb[0].mxu0
  %v824 = vadd.f32 %v753, %v823
  %v825 = vpop.f32.mrb[0].mxu0
  %v826 = vadd.f32 %v755, %v825
  %827 = vdwg.mxu0
  %vm828 = vcmp.gt.f32.partialorder %v824, 0.0
  %vm829 = vcmp.gt.f32.partialorder %v826, 0.0
  %v830 = vmin.f32 %v824, 0.0
  %v831 = vmin.f32 %v826, 0.0
  %v832 = vmul.f32 %v830, 1.442695
  %v833 = vpow.pop %v832
  %v834 = vmul.f32 %v831, 1.442695
  %v835 = vpow.pop %v834
  %v836 = vsub.f32 %v833, 1.0
  %v837 = vsub.f32 %v835, 1.0
  %v838 = vsel %vm828, %v824, %v836
  %v839 = vsel %vm829, %v826, %v837
  %v840 = vld [vmem:[%s5] sm:$0xff]
  %v841 = vld [vmem:[%s6] sm:$0xf]
  %843 = vset.pattern.permute.xlu0 0
  %844 = vperm.xlu0 %843, %v841
  %v845 = vpop.permute.xlu0 %844
  %v848 = vcombine.high %v840, %v840
  %v849 = vsel %vm611, %v848, 0
  %v852 = vsel %vm611, %v839, 0
  %854 = vmatprep.subr.mxu0 %v852
  %855 = vmatpush1.xpose.msra.mxu0 %v838
  %856 = vmatprep.subr.mxu0 0.0
  %857 = vmatpush1.xpose.msra.mxu0 0.0
  %858 = vmatprep.subr.mxu0 0.0
  %859 = vmatpush1.xpose.msra.mxu0 0.0
  %860 = vmatprep.subr.mxu0 0.0
  %861 = vmatpush1.xpose.msra.mxu0 0.0
  %862 = vmatprep.subr.mxu0 0.0
  %863 = vmatpush1.xpose.msra.mxu0 0.0
  %864 = vmatprep.subr.mxu0 0.0
  %865 = vmatpush1.xpose.msra.mxu0 0.0
  %866 = vmatprep.subr.mxu0 0.0
  %867 = vmatpush1.xpose.msra.mxu0 0.0
  %868 = vmatprep.subr.mxu0 0.0
  %869 = vmatpush1.xpose.msra.mxu0 0.0
  %870 = vmatprep.subr.mxu0 0.0
  %871 = vmatpush1.xpose.msra.mxu0 0.0
  %872 = vmatprep.subr.mxu0 0.0
  %873 = vmatpush1.xpose.msra.mxu0 0.0
  %874 = vmatprep.subr.mxu0 0.0
  %875 = vmatpush1.xpose.msra.mxu0 0.0
  %876 = vmatprep.subr.mxu0 0.0
  %877 = vmatpush1.xpose.msra.mxu0 0.0
  %878 = vmatprep.subr.mxu0 0.0
  %879 = vmatpush1.xpose.msra.mxu0 0.0
  %880 = vmatprep.subr.mxu0 0.0
  %881 = vmatpush1.xpose.msra.mxu0 0.0
  %882 = vmatprep.subr.mxu0 0.0
  %883 = vmatpush1.xpose.msra.mxu0 0.0
  %884 = vmatprep.subr.mxu0 0.0
  %885 = vmatpush1.xpose.msra.mxu0 0.0
  %886 = vmatprep.subr.mxu0 0.0
  %887 = vmatpush1.xpose.msra.mxu0 0.0
  %888 = vmatprep.subr.mxu0 0.0
  %889 = vmatpush1.xpose.msra.mxu0 0.0
  %890 = vmatprep.subr.mxu0 0.0
  %891 = vmatpush1.xpose.msra.mxu0 0.0
  %892 = vmatprep.subr.mxu0 0.0
  %893 = vmatpush1.xpose.msra.mxu0 0.0
  %894 = vmatprep.subr.mxu0 0.0
  %895 = vmatpush1.xpose.msra.mxu0 0.0
  %896 = vmatprep.subr.mxu0 0.0
  %897 = vmatpush1.xpose.msra.mxu0 0.0
  %898 = vmatprep.subr.mxu0 0.0
  %899 = vmatpush1.xpose.msra.mxu0 0.0
  %900 = vmatprep.subr.mxu0 0.0
  %901 = vmatpush1.xpose.msra.mxu0 0.0
  %902 = vmatprep.subr.mxu0 0.0
  %903 = vmatpush1.xpose.msra.mxu0 0.0
  %904 = vmatprep.subr.mxu0 0.0
  %905 = vmatpush1.xpose.msra.mxu0 0.0
  %906 = vmatprep.subr.mxu0 0.0
  %907 = vmatpush1.xpose.msra.mxu0 0.0
  %908 = vmatprep.subr.mxu0 0.0
  %909 = vmatpush1.xpose.msra.mxu0 0.0
  %910 = vmatprep.subr.mxu0 0.0
  %911 = vmatpush1.xpose.msra.mxu0 0.0
  %912 = vmatprep.subr.mxu0 0.0
  %913 = vmatpush1.xpose.msra.mxu0 0.0
  %914 = vmatprep.subr.mxu0 0.0
  %915 = vmatpush1.xpose.msra.mxu0 0.0
  %916 = vmatprep.subr.mxu0 0.0
  %917 = vmatpush1.xpose.msra.mxu0 0.0
  %918 = vmatprep.mubr.f32.mxu0 %v849
  %919 = vmatmul.mubr.f32.gmra.mrb[0].mxu0 %v840
  %v920 = vpop.f32.mrb[0].mxu0
  %v921 = vadd.f32 %v845, %v920
  %v922 = vpop.f32.mrb[0].mxu0
  %923 = vdwg.mxu0
  %vm924 = vcmask 11264
  %v925 = vsel %vm924, %v921, -inf
  %v926 = vrot.slane %v925, 4
  %v927 = vmax.f32 %v925, %v926
  %v928 = vrot.slane %v927, 2
  %v929 = vmax.f32 %v927, %v928
  %v930 = vrot.slane %v929, 1
  %v931 = vmax.f32 %v929, %v930
  %v932 = vsub.f32 %v921, %v931
  %v933 = vmul.f32 %v932, 1.442695
  %v934 = vpow.pop %v933
  %v935 = vsel %vm924, %v934, 0.0
  %v936 = vrot.slane %v935, 4
  %v937 = vadd.f32 %v935, %v936
  %v938 = vrot.slane %v937, 2
  %v939 = vadd.f32 %v937, %v938
  %v940 = vrot.slane %v939, 1
  %v941 = vadd.f32 %v939, %v940
  %v942 = vlog2.pop %v941
  %v943 = vmul.f32 %v942, 0.6931472
  %v944 = vsub.f32 %v932, %v943
  %945 = vst.msk [vmem:[%s7] sm:$0xf] %vm924, %v944
  // Predicated region
  $region30: #{tpu_custom_call.1} parent=0 // pred_check
    _
  $region31: #{tpu_custom_call.1} parent=0 // pred_check_branch
    %947 = sbr.rel (0) target = $region33
  $region32: #{tpu_custom_call.1} parent=0 // pred_region
    _
  $region33: #{tpu_custom_call.1} parent=0 // pred_fallthru
    _
  // Predicated region
  $region34: #{tpu_custom_call.1} parent=0 // pred_check
    _
  $region35: #{tpu_custom_call.1} parent=0 // pred_check_branch
    %949 = sbr.rel (0) target = $region37
  $region36: #{tpu_custom_call.1} parent=0 // pred_region
    _
  $region37: #{tpu_custom_call.1} parent=0 // pred_fallthru
    _

</llo_original>
